<compile_context>
chip_gen: v5e
topology: v5e:2x2
jax: 0.10.0
libtpu: 0.0.40
codegen_flags: <defaults>
</compile_context>

<pallas_src>
import numpy as np
import jax
import jax.numpy as jnp
from jax.experimental import pallas as pl
from jax.experimental.pallas import tpu as pltpu

_LANE = 128
_SUBLANE = {1: 32, 2: 16, 4: 8, 8: 8}   # dtype-itemsize -> native sublane pack
_TARGET_TILE_BYTES = 2 << 20            # ~2 MiB per array per grid step
_MIN_TILE_BYTES = 256 << 10             # don't shrink tiles below this
_MIN_STEPS = 8                          # >= 4 steps per TC on 2-TC chips (v7x)


def _plms_kernel(coef_ref, x_ref, n_ref, o_ref):
    # coef_ref (SMEM f32[2]): [k1, k2] with
    #   k1 = 1 + (a_prev - a_t) / (sqrt(a_t) * (sqrt(a_t) + sqrt(a_prev)))
    #   k2 = -(a_prev - a_t) / (sqrt(a_t) * (sqrt((1-a_prev)*a_t) + sqrt((1-a_t)*a_prev)))
    k1 = coef_ref[0]
    k2 = coef_ref[1]
    x = x_ref[...].astype(jnp.float32)
    n = n_ref[...].astype(jnp.float32)
    o_ref[...] = (k1 * x + k2 * n).astype(o_ref.dtype)


def _choose_blocks(lead, rows, cols, itemsize):
    """Pick a (block_lead, block_r, block_c) tile, dtype- and size-aware."""
    sub = _SUBLANE.get(itemsize, 8)
    row_bytes = rows * cols * itemsize
    bl, br, bc = lead, rows, cols

    if row_bytes >= _TARGET_TILE_BYTES:
        # A single leading-index slice is already >= the target tile: split it.
        bl = 1
        if rows > sub:
            br = min(rows, max(sub, (_TARGET_TILE_BYTES // (cols * itemsize)) // sub * sub))
        if br * cols * itemsize > _TARGET_TILE_BYTES and cols > _LANE:
            bc = min(cols, max(_LANE, (_TARGET_TILE_BYTES // (br * itemsize)) // _LANE * _LANE))
    else:
        bl = max(1, min(lead, _TARGET_TILE_BYTES // row_bytes))

    # For large inputs, guarantee enough grid steps that input DMA, compute and
    # output writeback actually overlap (and both v7x TCs get several steps).
    total_bytes = lead * rows * cols * itemsize
    if total_bytes >= _MIN_STEPS * _MIN_TILE_BYTES:
        def steps(a, b, c):
            return pl.cdiv(lead, a) * pl.cdiv(rows, b) * pl.cdiv(cols, c)
        while (steps(bl, br, bc) < _MIN_STEPS
               and bl * br * bc * itemsize > _MIN_TILE_BYTES):
            if bl > 1:
                bl = (bl + 1) // 2
            elif br > sub:
                br = max(sub, (br // 2) // sub * sub)
            elif bc > _LANE:
                bc = max(_LANE, (bc // 2) // _LANE * _LANE)
            else:
                break
    return bl, br, bc


@jax.jit
def plms_forward(alphas_cumprod, x, noise_t, t, t_prev):
    """Pallas implementation of PLMSNoisePredictor.forward."""
    orig_shape = x.shape
    dtype = x.dtype
    itemsize = np.dtype(dtype).itemsize

    # --- scalar coefficient glue (fused into this one jitted program) ---
    a_t = alphas_cumprod[t].astype(jnp.float32)
    a_prev = alphas_cumprod[t_prev].astype(jnp.float32)
    a_t_sq = jnp.sqrt(a_t)
    a_prev_sq = jnp.sqrt(a_prev)
    d = a_prev - a_t
    c1 = 1.0 / (a_t_sq * (a_t_sq + a_prev_sq))
    c2 = 1.0 / (a_t_sq * (jnp.sqrt((1.0 - a_prev) * a_t)
                          + jnp.sqrt((1.0 - a_t) * a_prev)))
    coefs = jnp.stack([1.0 + d * c1, -d * c2]).astype(jnp.float32)

    # --- collapse leading dims only (free: last-two-dims layout unchanged) ---
    if x.ndim >= 3:
        lead = int(np.prod(orig_shape[:-2]))
        rows, cols = int(orig_shape[-2]), int(orig_shape[-1])
    elif x.ndim == 2:
        lead, rows, cols = 1, int(orig_shape[0]), int(orig_shape[1])
    else:
        lead, rows, cols = 1, 1, int(np.prod(orig_shape))
    x3 = x.reshape(lead, rows, cols)
    n3 = noise_t.reshape(lead, rows, cols)

    # --- tiling (no padding, no trailing slice; ragged blocks are masked) ---
    bl, br, bc = _choose_blocks(lead, rows, cols, itemsize)
    grid = (pl.cdiv(lead, bl), pl.cdiv(rows, br), pl.cdiv(cols, bc))

    cparams = dict(dimension_semantics=("parallel", "parallel", "parallel"))
    vmem_needed = 3 * 2 * bl * br * bc * itemsize + (512 << 10)
    if vmem_needed > (12 << 20):
        # Only for odd shapes whose last two dims cannot be tiled smaller.
        cparams["vmem_limit_bytes"] = int(min(vmem_needed, 48 << 20))

    out = pl.pallas_call(
        _plms_kernel,
        out_shape=jax.ShapeDtypeStruct((lead, rows, cols), dtype),
        grid=grid,
        in_specs=[
            pl.BlockSpec(memory_space=pltpu.MemorySpace.SMEM),      # [k1, k2]
            pl.BlockSpec((bl, br, bc), lambda i, j, k: (i, j, k)),  # x tile
            pl.BlockSpec((bl, br, bc), lambda i, j, k: (i, j, k)),  # noise_t tile
        ],
        out_specs=pl.BlockSpec((bl, br, bc), lambda i, j, k: (i, j, k)),
        compiler_params=pltpu.CompilerParams(**cparams),
    )(coefs, x3, n3)

    return out.reshape(orig_shape)


def plms_forward_ref(alphas_cumprod, x, noise_t, t, t_prev):
    """Pure-JAX reference mirroring the PyTorch forward exactly."""
    bshape = (1,) * x.ndim                       # (1,1,1) or (1,1,1,1)
    a_t = alphas_cumprod[t].reshape(bshape)
    a_prev = alphas_cumprod[t_prev].reshape(bshape)
    a_t_sq, a_prev_sq = jnp.sqrt(a_t), jnp.sqrt(a_prev)
    x_delta = (a_prev - a_t) * (
        1.0 / (a_t_sq * (a_t_sq + a_prev_sq)) * x
        - 1.0 / (a_t_sq * (jnp.sqrt((1.0 - a_prev) * a_t)
                           + jnp.sqrt((1.0 - a_t) * a_prev))) * noise_t)
    return x + x_delta


if __name__ == "__main__":
    # Deterministic "parameter" init: linear beta schedule -> alphas_cumprod (T,).
    T = 50
    betas = np.linspace(1e-4, 2e-2, T, dtype=np.float64)
    alphas_cumprod = jnp.asarray(np.cumprod(1.0 - betas, axis=0), dtype=jnp.float32)

    key = jax.random.PRNGKey(0)
    t = jnp.int32(30)
    t_prev = jnp.int32(25)

    test_shapes = [
        (2, 4, 16, 16),    # 4-D "MoeSS" path, small
        (2, 32, 256),      # 3-D path, lane-dense last dim
        (2, 128, 2048),    # larger: exercises multi-step tiled pipeline
    ]

    ok = True
    for shp in test_shapes:
        key, kx, kn = jax.random.split(key, 3)
        x = jax.random.normal(kx, shp, dtype=jnp.float32)
        noise_t = jax.random.normal(kn, shp, dtype=jnp.float32)

        out = plms_forward(alphas_cumprod, x, noise_t, t, t_prev)
        jax.block_until_ready(out)

        ref = plms_forward_ref(alphas_cumprod, x, noise_t, t, t_prev)
        np.testing.assert_allclose(np.asarray(out), np.asarray(ref),
                                   rtol=1e-5, atol=1e-5)

    if ok:
        print("KERNEL_OK")
</pallas_src>

<mosaic_0001>
module attributes {stable_mosaic.version = 11 : i64} {
  func.func @_plms_kernel(%arg0: i32, %arg1: i32, %arg2: i32, %arg3: memref<2xf32, #tpu.memory_space<smem>>, %arg4: memref<8x16x16xf32, #tpu.memory_space<vmem>>, %arg5: memref<8x16x16xf32, #tpu.memory_space<vmem>>, %arg6: memref<8x16x16xf32, #tpu.memory_space<vmem>>) attributes {dimension_semantics = [#tpu.dimension_semantics<parallel>, #tpu.dimension_semantics<parallel>, #tpu.dimension_semantics<parallel>], iteration_bounds = array<i64: 1, 1, 1>, scalar_prefetch = 0 : i64, scratch_operands = 0 : i64, tpu.core_type = #tpu.core_type<tc>, window_params = [{transform_indices = @transform_0, window_bounds = array<i64: 2>}, {transform_indices = @transform_1, window_bounds = array<i64: 8, 16, 16>}, {transform_indices = @transform_2, window_bounds = array<i64: 8, 16, 16>}, {transform_indices = @transform_3, window_bounds = array<i64: 8, 16, 16>}]} {
    %c0 = arith.constant 0 : index
    %0 = memref.load %arg3[%c0] : memref<2xf32, #tpu.memory_space<smem>>
    %c1 = arith.constant 1 : index
    %1 = memref.load %arg3[%c1] : memref<2xf32, #tpu.memory_space<smem>>
    %c0_0 = arith.constant 0 : index
    %c0_1 = arith.constant 0 : index
    %c0_2 = arith.constant 0 : index
    %2 = vector.load %arg4[%c0_0, %c0_1, %c0_2] : memref<8x16x16xf32, #tpu.memory_space<vmem>>, vector<8x16x16xf32>
    %c0_3 = arith.constant 0 : index
    %c0_4 = arith.constant 0 : index
    %c0_5 = arith.constant 0 : index
    %3 = vector.load %arg5[%c0_3, %c0_4, %c0_5] : memref<8x16x16xf32, #tpu.memory_space<vmem>>, vector<8x16x16xf32>
    %4 = vector.broadcast %0 : f32 to vector<8x16x16xf32>
    %5 = arith.mulf %4, %2 : vector<8x16x16xf32>
    %6 = vector.broadcast %1 : f32 to vector<8x16x16xf32>
    %7 = arith.mulf %6, %3 : vector<8x16x16xf32>
    %8 = arith.addf %5, %7 : vector<8x16x16xf32>
    %c0_6 = arith.constant 0 : index
    %c0_7 = arith.constant 0 : index
    %c0_8 = arith.constant 0 : index
    %9 = vector.load %arg6[%c0_6, %c0_7, %c0_8] : memref<8x16x16xf32, #tpu.memory_space<vmem>>, vector<8x16x16xf32>
    tpu.vector_store %arg6[%c0_6, %c0_7, %c0_8], %8 {strides = array<i32>} : memref<8x16x16xf32, #tpu.memory_space<vmem>>, vector<8x16x16xf32>,
    return
  }
  func.func @transform_0(%arg0: i32, %arg1: i32, %arg2: i32) -> i32 {
    %c0_i32 = arith.constant 0 : i32
    %c0_i32_0 = arith.constant 0 : i32
    return %c0_i32 : i32
  }
  func.func @transform_1(%arg0: i32, %arg1: i32, %arg2: i32) -> (i32, i32, i32) {
    %c0_i32 = arith.constant 0 : i32
    return %arg0, %arg1, %arg2 : i32, i32, i32
  }
  func.func @transform_2(%arg0: i32, %arg1: i32, %arg2: i32) -> (i32, i32, i32) {
    %c0_i32 = arith.constant 0 : i32
    return %arg0, %arg1, %arg2 : i32, i32, i32
  }
  func.func @transform_3(%arg0: i32, %arg1: i32, %arg2: i32) -> (i32, i32, i32) {
    %c0_i32 = arith.constant 0 : i32
    return %arg0, %arg1, %arg2 : i32, i32, i32
  }
}

</mosaic_0001>

<llo_original>
// kernel: plms_forward.1
$region0: #{plms_forward.1}
  #allocation0 [shape = 'u32[]', space=smem, size = 0x4, offset = 0x4, fixed_abs, tag = 'smem constant byte address 0x4 - core index']
  #allocation1 [shape = 'u32[72,128]{1,0:T(1,128)}', space=vmem, size = 0x9000, scoped, tag = 'internal scratch']
  %s0 = inlined_call_operand.vmem [shape: f32[2], index: 0, kind: input, shape index: {}]
  %s1 = inlined_call_operand.hbm [shape: f32[8,16,16], index: 1, kind: input, shape index: {}]
  %s2 = inlined_call_operand.hbm [shape: f32[8,16,16], index: 2, kind: input, shape index: {}]
  %s3 = inlined_call_operand.hbm [shape: f32[8,16,16], index: 3, kind: output, shape index: {}]
  %s4 = sld [smem:[#allocation0]]
  $region34: #{plms_forward.1} parent=0
    _
  %s6 = ssub.s32 1, %s4
  %s7 = scalar_select 0, %s6, %s4
  $region1: #{plms_forward.1} parent=0
    #allocation2 [shape = 'u8[512]{0}', space=smem, size = 0x200, scoped, tag = 'input window, operand 0, single buffered']
    #allocation3 [shape = 's32[1]{0}', space=sflag, size = 0x4, scoped, tag = 'scoped memory for plms_forward.1']
    #allocation4 [shape = 's32[1]{0}', space=sflag, size = 0x4, scoped, tag = 'scoped memory for plms_forward.1']
    #allocation5 [shape = 's32[1]{0}', space=sflag, size = 0x4, scoped, tag = 'scoped memory for plms_forward.1']
    #allocation6 [shape = 'u8[65536]{0}', space=vmem, size = 0x10000, scoped, tag = 'input window, operand 1, single buffered']
    #allocation7 [shape = 'u8[65536]{0}', space=vmem, size = 0x10000, scoped, tag = 'input window, operand 2, single buffered']
    #allocation8 [shape = 's32[1]{0}', space=sflag, size = 0x4, scoped, tag = 'scoped memory for plms_forward.1']
    #allocation9 [shape = 'u8[65536]{0}', space=vmem, size = 0x10000, scoped, tag = 'output window, operand 0, single buffered']
    %8 = vsyncpa [#allocation5], 0
    %9 = vsyncpa [#allocation3], 0
    %10 = vsyncpa [#allocation8], 0
    %11 = vsyncpa [#allocation4], 0
    // Predicated region
    $region2: #{plms_forward.1} parent=1 // pred_check
      _
    $region3: #{plms_forward.1} parent=1 // pred_check_branch
      %13 = sbr.rel (0) target = $region5
    $region4: #{plms_forward.1} parent=1 // pred_region
      %15 = vsyncadd [#allocation5], 0
      %s17 = sshll.u32 %s0, 4
      %s18 = int_to_ptr.vmem [resolvable:$true] %s17
      %20 = dma.vmem_to_smem %s18, 16, [#allocation2], [#allocation5]
    $region5: #{plms_forward.1} parent=1 // pred_fallthru
      _
    // Predicated region
    $region6: #{plms_forward.1} parent=1 // pred_check
      _
    $region7: #{plms_forward.1} parent=1 // pred_check_branch
      %22 = sbr.rel (0) target = $region9
    $region8: #{plms_forward.1} parent=1 // pred_region
      %24 = vsyncadd [#allocation3], 0
      %s25 = sshll.u32 %s1, 4
      %s26 = int_to_ptr.hbm [resolvable:$true] %s25
      %s27 = sshll.u32 [#allocation6], 4
      %s28 = int_to_ptr.vmem [resolvable:$true] %s27
      %33 = dma.hbm_to_vmem [thread:$0]  %s26, 2048, %s28, [#allocation3], 128, 128, 8
    $region9: #{plms_forward.1} parent=1 // pred_fallthru
      _
    // Predicated region
    $region10: #{plms_forward.1} parent=1 // pred_check
      _
    $region11: #{plms_forward.1} parent=1 // pred_check_branch
      %35 = sbr.rel (0) target = $region13
    $region12: #{plms_forward.1} parent=1 // pred_region
      %37 = vsyncadd [#allocation8], 0
      %s38 = sshll.u32 %s2, 4
      %s39 = int_to_ptr.hbm [resolvable:$true] %s38
      %s40 = sshll.u32 [#allocation7], 4
      %s41 = int_to_ptr.vmem [resolvable:$true] %s40
      %46 = dma.hbm_to_vmem [thread:$0]  %s39, 2048, %s41, [#allocation8], 128, 128, 8
    $region13: #{plms_forward.1} parent=1 // pred_fallthru
      _
    // Predicated region
    $region14: #{plms_forward.1} parent=1 // pred_check
      _
    $region15: #{plms_forward.1} parent=1 // pred_check_branch
      %48 = sbr.rel (0) target = $region17
    $region16: #{plms_forward.1} parent=1 // pred_region
      %50 = dma.done [#allocation5], 16
    $region17: #{plms_forward.1} parent=1 // pred_fallthru
      _
    // Predicated region
    $region18: #{plms_forward.1} parent=1 // pred_check
      _
    $region19: #{plms_forward.1} parent=1 // pred_check_branch
      %52 = sbr.rel (0) target = $region21
    $region20: #{plms_forward.1} parent=1 // pred_region
      %54 = dma.done [#allocation3], 2048
    $region21: #{plms_forward.1} parent=1 // pred_fallthru
      _
    // Predicated region
    $region22: #{plms_forward.1} parent=1 // pred_check
      _
    $region23: #{plms_forward.1} parent=1 // pred_check_branch
      %56 = sbr.rel (0) target = $region25
    $region24: #{plms_forward.1} parent=1 // pred_region
      %58 = dma.done [#allocation8], 2048
    $region25: #{plms_forward.1} parent=1 // pred_fallthru
      _
    %59 = sfence
    %s60 = sld [smem:[#allocation2]]
    %s61 = sld [smem:[#allocation2 + $0x1]]
    %v62 = vld [vmem:[#allocation6] sm:$0xff]
    %v63 = vld [vmem:[#allocation6 + $0x8] sm:$0xff]
    %v64 = vld [vmem:[#allocation6 + $0x10] sm:$0xff]
    %v65 = vld [vmem:[#allocation6 + $0x18] sm:$0xff]
    %v66 = vld [vmem:[#allocation6 + $0x20] sm:$0xff]
    %v67 = vld [vmem:[#allocation6 + $0x28] sm:$0xff]
    %v68 = vld [vmem:[#allocation6 + $0x30] sm:$0xff]
    %v69 = vld [vmem:[#allocation6 + $0x38] sm:$0xff]
    %v70 = vld [vmem:[#allocation6 + $0x40] sm:$0xff]
    %v71 = vld [vmem:[#allocation6 + $0x48] sm:$0xff]
    %v72 = vld [vmem:[#allocation6 + $0x50] sm:$0xff]
    %v73 = vld [vmem:[#allocation6 + $0x58] sm:$0xff]
    %v74 = vld [vmem:[#allocation6 + $0x60] sm:$0xff]
    %v75 = vld [vmem:[#allocation6 + $0x68] sm:$0xff]
    %v76 = vld [vmem:[#allocation6 + $0x70] sm:$0xff]
    %v77 = vld [vmem:[#allocation6 + $0x78] sm:$0xff]
    %v78 = vld [vmem:[#allocation7] sm:$0xff]
    %v79 = vld [vmem:[#allocation7 + $0x8] sm:$0xff]
    %v80 = vld [vmem:[#allocation7 + $0x10] sm:$0xff]
    %v81 = vld [vmem:[#allocation7 + $0x18] sm:$0xff]
    %v82 = vld [vmem:[#allocation7 + $0x20] sm:$0xff]
    %v83 = vld [vmem:[#allocation7 + $0x28] sm:$0xff]
    %v84 = vld [vmem:[#allocation7 + $0x30] sm:$0xff]
    %v85 = vld [vmem:[#allocation7 + $0x38] sm:$0xff]
    %v86 = vld [vmem:[#allocation7 + $0x40] sm:$0xff]
    %v87 = vld [vmem:[#allocation7 + $0x48] sm:$0xff]
    %v88 = vld [vmem:[#allocation7 + $0x50] sm:$0xff]
    %v89 = vld [vmem:[#allocation7 + $0x58] sm:$0xff]
    %v90 = vld [vmem:[#allocation7 + $0x60] sm:$0xff]
    %v91 = vld [vmem:[#allocation7 + $0x68] sm:$0xff]
    %v92 = vld [vmem:[#allocation7 + $0x70] sm:$0xff]
    %v93 = vld [vmem:[#allocation7 + $0x78] sm:$0xff]
    %v94 = vstv %s60
    %v95 = vmul.f32 %v94, %v62
    %v96 = vmul.f32 %v94, %v63
    %v97 = vmul.f32 %v94, %v64
    %v98 = vmul.f32 %v94, %v65
    %v99 = vmul.f32 %v94, %v66
    %v100 = vmul.f32 %v94, %v67
    %v101 = vmul.f32 %v94, %v68
    %v102 = vmul.f32 %v94, %v69
    %v103 = vmul.f32 %v94, %v70
    %v104 = vmul.f32 %v94, %v71
    %v105 = vmul.f32 %v94, %v72
    %v106 = vmul.f32 %v94, %v73
    %v107 = vmul.f32 %v94, %v74
    %v108 = vmul.f32 %v94, %v75
    %v109 = vmul.f32 %v94, %v76
    %v110 = vmul.f32 %v94, %v77
    %v111 = vstv %s61
    %v112 = vmul.f32 %v111, %v78
    %v113 = vmul.f32 %v111, %v79
    %v114 = vmul.f32 %v111, %v80
    %v115 = vmul.f32 %v111, %v81
    %v116 = vmul.f32 %v111, %v82
    %v117 = vmul.f32 %v111, %v83
    %v118 = vmul.f32 %v111, %v84
    %v119 = vmul.f32 %v111, %v85
    %v120 = vmul.f32 %v111, %v86
    %v121 = vmul.f32 %v111, %v87
    %v122 = vmul.f32 %v111, %v88
    %v123 = vmul.f32 %v111, %v89
    %v124 = vmul.f32 %v111, %v90
    %v125 = vmul.f32 %v111, %v91
    %v126 = vmul.f32 %v111, %v92
    %v127 = vmul.f32 %v111, %v93
    %v128 = vadd.f32 %v95, %v112
    %v129 = vadd.f32 %v96, %v113
    %v130 = vadd.f32 %v97, %v114
    %v131 = vadd.f32 %v98, %v115
    %v132 = vadd.f32 %v99, %v116
    %v133 = vadd.f32 %v100, %v117
    %v134 = vadd.f32 %v101, %v118
    %v135 = vadd.f32 %v102, %v119
    %v136 = vadd.f32 %v103, %v120
    %v137 = vadd.f32 %v104, %v121
    %v138 = vadd.f32 %v105, %v122
    %v139 = vadd.f32 %v106, %v123
    %v140 = vadd.f32 %v107, %v124
    %v141 = vadd.f32 %v108, %v125
    %v142 = vadd.f32 %v109, %v126
    %v143 = vadd.f32 %v110, %v127
    %vm144 = vcmask 130048
    %145 = vst.msk [vmem:[#allocation9] sm:$0xff] %vm144, %v128
    %146 = vst.msk [vmem:[#allocation9 + $0x8] sm:$0xff] %vm144, %v129
    %147 = vst.msk [vmem:[#allocation9 + $0x10] sm:$0xff] %vm144, %v130
    %148 = vst.msk [vmem:[#allocation9 + $0x18] sm:$0xff] %vm144, %v131
    %149 = vst.msk [vmem:[#allocation9 + $0x20] sm:$0xff] %vm144, %v132
    %150 = vst.msk [vmem:[#allocation9 + $0x28] sm:$0xff] %vm144, %v133
    %151 = vst.msk [vmem:[#allocation9 + $0x30] sm:$0xff] %vm144, %v134
    %152 = vst.msk [vmem:[#allocation9 + $0x38] sm:$0xff] %vm144, %v135
    %153 = vst.msk [vmem:[#allocation9 + $0x40] sm:$0xff] %vm144, %v136
    %154 = vst.msk [vmem:[#allocation9 + $0x48] sm:$0xff] %vm144, %v137
    %155 = vst.msk [vmem:[#allocation9 + $0x50] sm:$0xff] %vm144, %v138
    %156 = vst.msk [vmem:[#allocation9 + $0x58] sm:$0xff] %vm144, %v139
    %157 = vst.msk [vmem:[#allocation9 + $0x60] sm:$0xff] %vm144, %v140
    %158 = vst.msk [vmem:[#allocation9 + $0x68] sm:$0xff] %vm144, %v141
    %159 = vst.msk [vmem:[#allocation9 + $0x70] sm:$0xff] %vm144, %v142
    %160 = vst.msk [vmem:[#allocation9 + $0x78] sm:$0xff] %vm144, %v143
    // Predicated region
    $region26: #{plms_forward.1} parent=1 // pred_check
      _
    $region27: #{plms_forward.1} parent=1 // pred_check_branch
      %162 = sbr.rel (0) target = $region29
    $region28: #{plms_forward.1} parent=1 // pred_region
      %164 = vsyncadd [#allocation4], 0
      %s165 = sshll.u32 [#allocation9], 4
      %s166 = int_to_ptr.vmem [resolvable:$true] %s165
      %s167 = sshll.u32 %s3, 4
      %s168 = int_to_ptr.hbm [resolvable:$true] %s167
      %173 = dma.vmem_to_hbm [thread:$0]  %s166, 2048, %s168, [#allocation4], 128, 128, 8
    $region29: #{plms_forward.1} parent=1 // pred_fallthru
      _
    // Predicated region
    $region30: #{plms_forward.1} parent=1 // pred_check
      _
    $region31: #{plms_forward.1} parent=1 // pred_check_branch
      %175 = sbr.rel (0) target = $region33
    $region32: #{plms_forward.1} parent=1 // pred_region
      %177 = dma.done [#allocation4], 2048
    $region33: #{plms_forward.1} parent=1 // pred_fallthru
      _
    %178 = vsyncpa [#allocation3], 1
    %179 = vsyncpa [#allocation8], 1
    %180 = vsyncpa [#allocation4], 1
    %181 = vsyncpa [#allocation5], 1

</llo_original>
